<compile_context>
chip_gen: v7x
topology: tpu7x:2x2x1
jax: 0.10.0
libtpu: 0.0.40
codegen_flags: <defaults>
</compile_context>

<pallas_src>
import functools

import jax
import jax.numpy as jnp
from jax import lax
from jax.experimental import pallas as pl
from jax.experimental.pallas import tpu as pltpu

_NEG_LARGE = -1e30  # finite "-inf" sentinel (avoids inf-inf -> nan; bf16-representable)


def _round_up(x: int, m: int) -> int:
    return (x + m - 1) // m * m


def _cdiv(a: int, b: int) -> int:
    return -(-a // b)


def _tpu_config():
    """Generation-aware defaults: scoped-VMEM limit, tile sizes, weight buffering."""
    try:
        kind = jax.devices()[0].device_kind.lower()
    except Exception:
        kind = ""
    if "v7" in kind:   # 64 MiB physical VMEM, 2 TensorCores/chip
        return dict(vmem_limit=48 * 1024 * 1024, tb=512, tv=1024, wbuf=2, two_cores=True)
    if "v6" in kind:   # 128 MiB VMEM
        return dict(vmem_limit=64 * 1024 * 1024, tb=512, tv=2048, wbuf=2, two_cores=False)
    if "v5" in kind:   # 128 MiB VMEM, slowest HBM -> deepest weight buffering
        return dict(vmem_limit=64 * 1024 * 1024, tb=512, tv=2048, wbuf=3, two_cores=False)
    # Unknown generation: conservative defaults.
    return dict(vmem_limit=32 * 1024 * 1024, tb=256, tv=1024, wbuf=2, two_cores=False)


def _logits_lse_kernel(x_ref, w_ref, b_ref, logits_ref, lse_ref, m_ref, l_ref):
    """Pass 1: per-(B tile, V tile) logits + online log-sum-exp across V tiles.

    x_ref      : (TB, D)  compute dtype, pre-summed context embedding
                 (same block is revisited across the V axis -> DMA'd once per B tile)
    w_ref      : (TV, D)  compute dtype (untransposed nn.Linear weight)
    b_ref      : (1, TV)  f32
    logits_ref : (TB, TV) logits dtype output (bf16 on the bf16 path)
    lse_ref    : (TB, 1)  f32 output (resident accumulator, written at last V tile)
    m_ref,l_ref: (TB, 1)  f32 scratch (running max / running sum-exp)
    """
    j = pl.program_id(1)

    @pl.when(j == 0)
    def _init():
        m_ref[...] = jnp.full_like(m_ref, _NEG_LARGE)
        l_ref[...] = jnp.zeros_like(l_ref)

    # (TB, D) . (TV, D)^T -> (TB, TV), f32 accumulation on the MXU.
    logits = lax.dot_general(
        x_ref[...], w_ref[...],
        dimension_numbers=(((1,), (1,)), ((), ())),
        preferred_element_type=jnp.float32,
    ) + b_ref[...]
    logits_ref[...] = logits.astype(logits_ref.dtype)

    # Online softmax statistics: always from the full-precision in-kernel f32
    # logits (NOT the narrowed stored copy).
    # TODO(synk): on v6e/v7x, if the single EUP (exp) slot saturates before the
    # MXU (small D), compute jnp.exp on bf16 inputs and accumulate the sum in f32.
    m_old = m_ref[...]
    m_new = jnp.maximum(m_old, jnp.max(logits, axis=-1, keepdims=True))
    l_ref[...] = (l_ref[...] * jnp.exp(m_old - m_new)
                  + jnp.sum(jnp.exp(logits - m_new), axis=-1, keepdims=True))
    m_ref[...] = m_new

    @pl.when(j == pl.num_programs(1) - 1)
    def _finalize():
        lse_ref[...] = m_ref[...] + jnp.log(l_ref[...])


def _normalize_kernel(logits_ref, lse_ref, o_ref):
    """Pass 2: log_probs = logits - lse (memory-bound elementwise, big tiles)."""
    o_ref[...] = logits_ref[...].astype(jnp.float32) - lse_ref[...]


@functools.partial(jax.jit, static_argnames=("compute_dtype",))
def cbow_forward(inputs, emb_table, linear_w, linear_b,
                 compute_dtype=jnp.bfloat16):
    """inputs: (B, C) int32; emb_table: (V, D); linear_w: (V, D); linear_b: (V,)."""
    B, C = inputs.shape
    V, D = emb_table.shape
    f32 = jnp.float32
    logits_dtype = (jnp.bfloat16 if jnp.dtype(compute_dtype) == jnp.dtype(jnp.bfloat16)
                    else f32)

    cfg = _tpu_config()
    cbytes = jnp.dtype(compute_dtype).itemsize
    lbytes = jnp.dtype(logits_dtype).itemsize

    # ---- tile sizes: sublane(8)/lane(128)-aligned, generation-aware ----
    TB = min(cfg["tb"], _round_up(B, 8))
    if cfg["two_cores"] and B > 8 and _round_up(B, TB) // TB < 2:
        # Megacore guard (v7x): make sure each TensorCore gets >= 1 B tile.
        TB = _round_up(_cdiv(B, 2), 8)
    TV = min(cfg["tv"], _round_up(V, 128))

    budget = int(cfg["vmem_limit"] * 0.75)

    def _p1_bytes(tb, tv):
        # double-buffered input/output blocks + weight buffering + tiny scratch
        return (2 * tb * D * cbytes + cfg["wbuf"] * tv * D * cbytes + 2 * tv * 4
                + 2 * tb * tv * lbytes + 4 * tb * 4)

    while _p1_bytes(TB, TV) > budget and TV > 128:
        TV //= 2
    while _p1_bytes(TB, TV) > budget and TB > 8:
        TB = max(8, _round_up(TB // 2, 8))

    Bp = _round_up(B, TB)
    Vp = _round_up(V, TV)
    grid = (Bp // TB, Vp // TV)

    # ---- operand prep: pre-summed context embedding, NO transposed weight copy ----
    # TODO(synk): optionally fuse the embedding gather in-kernel via
    # PrefetchScalarGridSpec (indices in SMEM, emb_table in pl.ANY) to avoid this
    # (B, D) HBM round trip entirely.
    summed = jnp.take(emb_table, inputs, axis=0).sum(axis=1).astype(compute_dtype)  # (B, D)
    if Bp != B:
        summed = jnp.pad(summed, ((0, Bp - B), (0, 0)))
    w = linear_w.astype(compute_dtype)             # (V, D), contracted on D in-kernel
    b = linear_b.astype(f32).reshape(1, V)
    if Vp != V:
        w = jnp.pad(w, ((0, Vp - V), (0, 0)))
        b = jnp.pad(b, ((0, 0), (0, Vp - V)), constant_values=_NEG_LARGE)

    # Deeper weight buffering on v5e only (hides the exposed per-step weight DMA).
    if cfg["wbuf"] > 2:
        w_spec = pl.BlockSpec((TV, D), lambda i, j: (j, 0),
                              pipeline_mode=pl.Buffered(cfg["wbuf"]))
    else:
        w_spec = pl.BlockSpec((TV, D), lambda i, j: (j, 0))

    cparams = pltpu.CompilerParams(
        dimension_semantics=("parallel", "arbitrary"),
        vmem_limit_bytes=cfg["vmem_limit"],
    )
    cost1 = pl.CostEstimate(
        flops=2 * Bp * D * Vp,
        transcendentals=Bp * Vp + Bp,
        bytes_accessed=(Bp * D * cbytes                 # summed context
                        + grid[0] * Vp * D * cbytes     # weight, re-read per B tile
                        + Vp * 4                        # bias
                        + Bp * Vp * lbytes              # logits write
                        + Bp * 4),                      # lse write
    )

    # ---- pass 1: logits + online lse over the V grid axis ----
    logits, lse = pl.pallas_call(
        _logits_lse_kernel,
        grid=grid,
        in_specs=[
            pl.BlockSpec((TB, D), lambda i, j: (i, 0)),
            w_spec,
            pl.BlockSpec((1, TV), lambda i, j: (0, j)),
        ],
        out_specs=[
            pl.BlockSpec((TB, TV), lambda i, j: (i, j)),
            pl.BlockSpec((TB, 1), lambda i, j: (i, 0)),
        ],
        out_shape=[
            jax.ShapeDtypeStruct((Bp, Vp), logits_dtype),
            jax.ShapeDtypeStruct((Bp, 1), f32),
        ],
        scratch_shapes=[
            pltpu.VMEM((TB, 1), f32),   # running max
            pltpu.VMEM((TB, 1), f32),   # running sum-exp
        ],
        compiler_params=cparams,
        cost_estimate=cost1,
    )(summed, w, b)

    # ---- pass 2: elementwise normalization with large, lane-dense tiles ----
    TB2 = TB
    while TB2 * 2 <= 1024 and Bp % (TB2 * 2) == 0:
        TB2 *= 2

    def _p2_bytes(tv2):
        return 2 * TB2 * tv2 * (lbytes + 4) + 2 * TB2 * 4

    TV2 = TV
    while TV2 * 2 <= Vp and Vp % (TV2 * 2) == 0 and _p2_bytes(TV2 * 2) <= budget:
        TV2 *= 2

    # In-place only on the f32 path (dtypes must match for aliasing).
    alias = {0: 0} if logits_dtype == f32 else {}
    cost2 = pl.CostEstimate(
        flops=Bp * Vp,
        transcendentals=0,
        bytes_accessed=Bp * Vp * (lbytes + 4) + Bp * 4,
    )
    log_probs = pl.pallas_call(
        _normalize_kernel,
        grid=(Bp // TB2, Vp // TV2),
        in_specs=[
            pl.BlockSpec((TB2, TV2), lambda i, j: (i, j)),
            pl.BlockSpec((TB2, 1), lambda i, j: (i, 0)),
        ],
        out_specs=pl.BlockSpec((TB2, TV2), lambda i, j: (i, j)),
        out_shape=jax.ShapeDtypeStruct((Bp, Vp), f32),
        input_output_aliases=alias,
        compiler_params=pltpu.CompilerParams(
            dimension_semantics=("parallel", "parallel"),
            vmem_limit_bytes=cfg["vmem_limit"],
        ),
        cost_estimate=cost2,
    )(logits, lse)

    return log_probs[:B, :V]


if __name__ == "__main__":
    # Small, deterministic setup: vocab=128, embedding_dim=32, batch=2, context=4
    V, D = 128, 32
    B, C = 2, 4

    key = jax.random.PRNGKey(0)
    k_emb, k_w, k_b, k_idx = jax.random.split(key, 4)

    emb_table = jax.random.normal(k_emb, (V, D), dtype=jnp.float32)
    linear_w = jax.random.normal(k_w, (V, D), dtype=jnp.float32) * 0.1  # nn.Linear weight (out, in)
    linear_b = jax.random.normal(k_b, (V,), dtype=jnp.float32) * 0.1
    inputs = jax.random.randint(k_idx, (B, C), 0, V, dtype=jnp.int32)

    # pure-JAX reference (f32)
    ref_embeds = jnp.take(emb_table, inputs, axis=0).sum(axis=1)          # (B, D)
    ref_logits = ref_embeds @ linear_w.T + linear_b
    ref = jax.nn.log_softmax(ref_logits, axis=-1)

    # f32 compute path (f32 logits intermediate): strict check
    out_f32 = jax.block_until_ready(
        cbow_forward(inputs, emb_table, linear_w, linear_b,
                     compute_dtype=jnp.float32))
    assert out_f32.shape == (B, V)
    assert jnp.allclose(out_f32, ref, atol=1e-4, rtol=1e-4), "f32 mismatch vs reference"

    # bf16 weight/activation stream + bf16 logits intermediate (default path):
    # reference mirrors the kernel: bf16 context sum & weights, f32-accum matmul,
    # lse from f32 logits, output = bf16-rounded logits - lse.
    out_bf16 = jax.block_until_ready(
        cbow_forward(inputs, emb_table, linear_w, linear_b))
    summed_bf = ref_embeds.astype(jnp.bfloat16)
    logits_bf = jnp.dot(summed_bf, linear_w.astype(jnp.bfloat16).T,
                        preferred_element_type=jnp.float32) + linear_b
    lse_bf = jax.scipy.special.logsumexp(logits_bf, axis=-1, keepdims=True)
    ref_bf = logits_bf.astype(jnp.bfloat16).astype(jnp.float32) - lse_bf
    assert out_bf16.shape == (B, V)
    assert jnp.allclose(out_bf16, ref_bf, atol=5e-3, rtol=5e-3), "bf16 mismatch vs reference"

    print("KERNEL_OK")
</pallas_src>

<mosaic_0001>
module attributes {stable_mosaic.version = 11 : i64} {
  func.func @_normalize_kernel(%arg0: i32, %arg1: i32, %arg2: memref<8x128xf32, #tpu.memory_space<vmem>>, %arg3: memref<8x1xf32, #tpu.memory_space<vmem>>, %arg4: memref<8x128xf32, #tpu.memory_space<vmem>>) attributes {dimension_semantics = [#tpu.dimension_semantics<parallel>, #tpu.dimension_semantics<parallel>], iteration_bounds = array<i64: 1, 1>, scalar_prefetch = 0 : i64, scratch_operands = 0 : i64, tpu.core_type = #tpu.core_type<tc>, window_params = [{transform_indices = @transform_0, window_bounds = array<i64: 8, 128>}, {transform_indices = @transform_1, window_bounds = array<i64: 8, 1>}, {transform_indices = @transform_2, window_bounds = array<i64: 8, 128>}]} {
    %c0 = arith.constant 0 : index
    %c0_0 = arith.constant 0 : index
    %0 = vector.load %arg2[%c0, %c0_0] : memref<8x128xf32, #tpu.memory_space<vmem>>, vector<8x128xf32>
    %c0_1 = arith.constant 0 : index
    %c0_2 = arith.constant 0 : index
    %1 = vector.load %arg3[%c0_1, %c0_2] : memref<8x1xf32, #tpu.memory_space<vmem>>, vector<8x1xf32>
    %2 = vector.broadcast %1 : vector<8x1xf32> to vector<8x128xf32>
    %3 = arith.subf %0, %2 : vector<8x128xf32>
    %c0_3 = arith.constant 0 : index
    %c0_4 = arith.constant 0 : index
    %4 = vector.load %arg4[%c0_3, %c0_4] : memref<8x128xf32, #tpu.memory_space<vmem>>, vector<8x128xf32>
    tpu.vector_store %arg4[%c0_3, %c0_4], %3 {strides = array<i32>} : memref<8x128xf32, #tpu.memory_space<vmem>>, vector<8x128xf32>,
    return
  }
  func.func @transform_0(%arg0: i32, %arg1: i32) -> (i32, i32) {
    %c0_i32 = arith.constant 0 : i32
    return %arg0, %arg1 : i32, i32
  }
  func.func @transform_1(%arg0: i32, %arg1: i32) -> (i32, i32) {
    %c0_i32 = arith.constant 0 : i32
    %c0_i32_0 = arith.constant 0 : i32
    return %arg0, %c0_i32 : i32, i32
  }
  func.func @transform_2(%arg0: i32, %arg1: i32) -> (i32, i32) {
    %c0_i32 = arith.constant 0 : i32
    return %arg0, %arg1 : i32, i32
  }
}

module attributes {stable_mosaic.version = 11 : i64} {
  func.func @_logits_lse_kernel(%arg0: i32, %arg1: i32, %arg2: memref<8x32xf32, #tpu.memory_space<vmem>>, %arg3: memref<128x32xf32, #tpu.memory_space<vmem>>, %arg4: memref<1x128xf32, #tpu.memory_space<vmem>>, %arg5: memref<8x128xf32, #tpu.memory_space<vmem>>, %arg6: memref<8x1xf32, #tpu.memory_space<vmem>>, %arg7: memref<8x1xf32, #tpu.memory_space<vmem>>, %arg8: memref<8x1xf32, #tpu.memory_space<vmem>>) attributes {dimension_semantics = [#tpu.dimension_semantics<parallel>, #tpu.dimension_semantics<arbitrary>], iteration_bounds = array<i64: 1, 1>, scalar_prefetch = 0 : i64, scratch_operands = 2 : i64, tpu.core_type = #tpu.core_type<tc>, window_params = [{transform_indices = @transform_0, window_bounds = array<i64: 8, 32>}, {transform_indices = @transform_1, window_bounds = array<i64: 128, 32>}, {transform_indices = @transform_2, window_bounds = array<i64: 1, 128>}, {transform_indices = @transform_3, window_bounds = array<i64: 8, 128>}, {transform_indices = @transform_4, window_bounds = array<i64: 8, 1>}]} {
    %c0_i32 = arith.constant 0 : i32
    %0 = arith.cmpi eq, %arg1, %c0_i32 : i32
    %1 = arith.extui %0 : i1 to i32
    %c0_i32_0 = arith.constant 0 : i32
    %2 = arith.cmpi ne, %1, %c0_i32_0 : i32
    scf.if %2 {
      %cst_20 = arith.constant -1.000000e+30 : f32
      %29 = vector.broadcast %cst_20 : f32 to vector<8x1xf32>
      %c0_21 = arith.constant 0 : index
      %c0_22 = arith.constant 0 : index
      %30 = vector.load %arg7[%c0_21, %c0_22] : memref<8x1xf32, #tpu.memory_space<vmem>>, vector<8x1xf32>
      tpu.vector_store %arg7[%c0_21, %c0_22], %29 {strides = array<i32>} : memref<8x1xf32, #tpu.memory_space<vmem>>, vector<8x1xf32>,
      %cst_23 = arith.constant 0.000000e+00 : f32
      %31 = vector.broadcast %cst_23 : f32 to vector<8x1xf32>
      %c0_24 = arith.constant 0 : index
      %c0_25 = arith.constant 0 : index
      %32 = vector.load %arg8[%c0_24, %c0_25] : memref<8x1xf32, #tpu.memory_space<vmem>>, vector<8x1xf32>
      tpu.vector_store %arg8[%c0_24, %c0_25], %31 {strides = array<i32>} : memref<8x1xf32, #tpu.memory_space<vmem>>, vector<8x1xf32>,
    } else {
    }
    %c0 = arith.constant 0 : index
    %c0_1 = arith.constant 0 : index
    %3 = vector.load %arg2[%c0, %c0_1] : memref<8x32xf32, #tpu.memory_space<vmem>>, vector<8x32xf32>
    %c0_2 = arith.constant 0 : index
    %c0_3 = arith.constant 0 : index
    %4 = vector.load %arg3[%c0_2, %c0_3] : memref<128x32xf32, #tpu.memory_space<vmem>>, vector<128x32xf32>
    %cst = arith.constant dense<0.000000e+00> : vector<8x128xf32>
    %5 = tpu.matmul %3, %4, %cst {dimension_numbers = #tpu.dot_dimension_numbers<[1], [1], [0], [0], [0, 0, 1, 0], [], []>} : vector<8x32xf32>, vector<128x32xf32>, vector<8x128xf32> -> vector<8x128xf32>
    %c0_4 = arith.constant 0 : index
    %c0_5 = arith.constant 0 : index
    %6 = vector.load %arg4[%c0_4, %c0_5] : memref<1x128xf32, #tpu.memory_space<vmem>>, vector<1x128xf32>
    %7 = vector.broadcast %6 : vector<1x128xf32> to vector<8x128xf32>
    %8 = arith.addf %5, %7 : vector<8x128xf32>
    %c0_6 = arith.constant 0 : index
    %c0_7 = arith.constant 0 : index
    %9 = vector.load %arg5[%c0_6, %c0_7] : memref<8x128xf32, #tpu.memory_space<vmem>>, vector<8x128xf32>
    tpu.vector_store %arg5[%c0_6, %c0_7], %8 {strides = array<i32>} : memref<8x128xf32, #tpu.memory_space<vmem>>, vector<8x128xf32>,
    %c0_8 = arith.constant 0 : index
    %c0_9 = arith.constant 0 : index
    %10 = vector.load %arg7[%c0_8, %c0_9] : memref<8x1xf32, #tpu.memory_space<vmem>>, vector<8x1xf32>
    %cst_10 = arith.constant dense<0xFF800000> : vector<8xf32>
    %11 = vector.multi_reduction <maximumf>, %8, %cst_10 [1] : vector<8x128xf32> to vector<8xf32>
    %12 = vector.shape_cast %11 : vector<8xf32> to vector<8x1xf32>
    %13 = arith.maximumf %10, %12 : vector<8x1xf32>
    %c0_11 = arith.constant 0 : index
    %c0_12 = arith.constant 0 : index
    %14 = vector.load %arg8[%c0_11, %c0_12] : memref<8x1xf32, #tpu.memory_space<vmem>>, vector<8x1xf32>
    %15 = arith.subf %10, %13 : vector<8x1xf32>
    %16 = math.exp %15 : vector<8x1xf32>
    %17 = arith.mulf %14, %16 : vector<8x1xf32>
    %18 = vector.broadcast %13 : vector<8x1xf32> to vector<8x128xf32>
    %19 = arith.subf %8, %18 : vector<8x128xf32>
    %20 = math.exp %19 : vector<8x128xf32>
    %cst_13 = arith.constant dense<0.000000e+00> : vector<8xf32>
    %21 = vector.multi_reduction <add>, %20, %cst_13 [1] : vector<8x128xf32> to vector<8xf32>
    %22 = vector.shape_cast %21 : vector<8xf32> to vector<8x1xf32>
    %23 = arith.addf %17, %22 : vector<8x1xf32>
    %c0_14 = arith.constant 0 : index
    %c0_15 = arith.constant 0 : index
    %24 = vector.load %arg8[%c0_14, %c0_15] : memref<8x1xf32, #tpu.memory_space<vmem>>, vector<8x1xf32>
    tpu.vector_store %arg8[%c0_14, %c0_15], %23 {strides = array<i32>} : memref<8x1xf32, #tpu.memory_space<vmem>>, vector<8x1xf32>,
    %c0_16 = arith.constant 0 : index
    %c0_17 = arith.constant 0 : index
    %25 = vector.load %arg7[%c0_16, %c0_17] : memref<8x1xf32, #tpu.memory_space<vmem>>, vector<8x1xf32>
    tpu.vector_store %arg7[%c0_16, %c0_17], %13 {strides = array<i32>} : memref<8x1xf32, #tpu.memory_space<vmem>>, vector<8x1xf32>,
    %c0_i32_18 = arith.constant 0 : i32
    %26 = arith.cmpi eq, %arg1, %c0_i32_18 : i32
    %27 = arith.extui %26 : i1 to i32
    %c0_i32_19 = arith.constant 0 : i32
    %28 = arith.cmpi ne, %27, %c0_i32_19 : i32
    scf.if %28 {
      %c0_20 = arith.constant 0 : index
      %c0_21 = arith.constant 0 : index
      %29 = vector.load %arg7[%c0_20, %c0_21] : memref<8x1xf32, #tpu.memory_space<vmem>>, vector<8x1xf32>
      %c0_22 = arith.constant 0 : index
      %c0_23 = arith.constant 0 : index
      %30 = vector.load %arg8[%c0_22, %c0_23] : memref<8x1xf32, #tpu.memory_space<vmem>>, vector<8x1xf32>
      %31 = math.log %30 : vector<8x1xf32>
      %32 = arith.addf %29, %31 : vector<8x1xf32>
      %c0_24 = arith.constant 0 : index
      %c0_25 = arith.constant 0 : index
      %33 = vector.load %arg6[%c0_24, %c0_25] : memref<8x1xf32, #tpu.memory_space<vmem>>, vector<8x1xf32>
      tpu.vector_store %arg6[%c0_24, %c0_25], %32 {strides = array<i32>} : memref<8x1xf32, #tpu.memory_space<vmem>>, vector<8x1xf32>,
    } else {
    }
    return
  }
  func.func @transform_0(%arg0: i32, %arg1: i32) -> (i32, i32) {
    %c0_i32 = arith.constant 0 : i32
    %c0_i32_0 = arith.constant 0 : i32
    return %arg0, %c0_i32 : i32, i32
  }
  func.func @transform_1(%arg0: i32, %arg1: i32) -> (i32, i32) {
    %c0_i32 = arith.constant 0 : i32
    %c0_i32_0 = arith.constant 0 : i32
    return %arg1, %c0_i32 : i32, i32
  }
  func.func @transform_2(%arg0: i32, %arg1: i32) -> (i32, i32) {
    %c0_i32 = arith.constant 0 : i32
    %c0_i32_0 = arith.constant 0 : i32
    return %c0_i32, %arg1 : i32, i32
  }
  func.func @transform_3(%arg0: i32, %arg1: i32) -> (i32, i32) {
    %c0_i32 = arith.constant 0 : i32
    return %arg0, %arg1 : i32, i32
  }
  func.func @transform_4(%arg0: i32, %arg1: i32) -> (i32, i32) {
    %c0_i32 = arith.constant 0 : i32
    %c0_i32_0 = arith.constant 0 : i32
    return %arg0, %c0_i32 : i32, i32
  }
}

</mosaic_0001>

<llo_original>
// kernel: cbow_forward.3
$region0: #{cbow_forward.3}
  #allocation0 [shape = 'u32[]', space=smem, size = 0x4, offset = 0x4, fixed_abs, tag = 'smem constant byte address 0x4 - core index']
  #allocation1 [shape = 'u32[144,128]{1,0:T(1,128)}', space=vmem, size = 0x12000, scoped, tag = 'internal scratch']
  %s0 = inlined_call_operand.vmem [shape: f32[8,128], index: 0, kind: input, shape index: {}, may-alias: {0,2}]
  %s1 = inlined_call_operand.vmem [shape: f32[8,1], index: 1, kind: input, shape index: {}]
  %s2 = inlined_call_operand.vmem [shape: f32[8,128], index: 2, kind: output, shape index: {}, may-alias: {0,2}]
  %s3 = sld [smem:[#allocation0]]
  $region18: #{cbow_forward.3} parent=0
    _
  %s5 = ssub.s32 1, %s3
  %s6 = scalar_select 0, %s5, %s3
  // Predicated region
  $region2: #{cbow_forward.3} parent=0 // pred_check
    _
  $region3: #{cbow_forward.3} parent=0 // pred_check_branch
    %8 = sbr.rel (0) target = $region5
  $region4: #{cbow_forward.3} parent=0 // pred_region
    _
  $region5: #{cbow_forward.3} parent=0 // pred_fallthru
    _
  // Predicated region
  $region6: #{cbow_forward.3} parent=0 // pred_check
    _
  $region7: #{cbow_forward.3} parent=0 // pred_check_branch
    %10 = sbr.rel (0) target = $region9
  $region8: #{cbow_forward.3} parent=0 // pred_region
    _
  $region9: #{cbow_forward.3} parent=0 // pred_fallthru
    _
  %v11 = vld [vmem:[%s0] sm:$0xff]
  %v12 = vld [vmem:[%s1] sm:$0xff]
  %14 = vset.pattern.permute.xlu0 0
  %15 = vperm.xlu0 %14, %v12
  %v16 = vpop.permute.xlu0 %15
  %v18 = vsub.f32 %v11, %v16
  %19 = vst [vmem:[%s2] sm:$0xff] %v18
  // Predicated region
  $region10: #{cbow_forward.3} parent=0 // pred_check
    _
  $region11: #{cbow_forward.3} parent=0 // pred_check_branch
    %21 = sbr.rel (0) target = $region13
  $region12: #{cbow_forward.3} parent=0 // pred_region
    _
  $region13: #{cbow_forward.3} parent=0 // pred_fallthru
    _
  // Predicated region
  $region14: #{cbow_forward.3} parent=0 // pred_check
    _
  $region15: #{cbow_forward.3} parent=0 // pred_check_branch
    %23 = sbr.rel (0) target = $region17
  $region16: #{cbow_forward.3} parent=0 // pred_region
    _
  $region17: #{cbow_forward.3} parent=0 // pred_fallthru
    _

// kernel: cbow_forward.2
$region0: #{cbow_forward.2}
  #allocation0 [shape = 'u32[]', space=smem, size = 0x4, offset = 0x4, fixed_abs, tag = 'smem constant byte address 0x4 - core index']
  #allocation1 [shape = 'u32[144,128]{1,0:T(1,128)}', space=vmem, size = 0x12000, scoped, tag = 'internal scratch']
  #allocation2 [shape = 'f32[8,1]{1,0:T(8,128)}', space=vmem, size = 0x1000, scoped, tag = 'scratch operand']
  #allocation3 [shape = 'f32[8,1]{1,0:T(8,128)}', space=vmem, size = 0x1000, scoped, tag = 'scratch operand']
  %s0 = inlined_call_operand.vmem [shape: f32[8,32], index: 0, kind: input, shape index: {}]
  %s1 = inlined_call_operand.vmem [shape: f32[128,32], index: 1, kind: input, shape index: {}]
  %s2 = inlined_call_operand.vmem [shape: f32[1,128], index: 2, kind: input, shape index: {}]
  %s3 = inlined_call_operand.vmem [shape: f32[8,128], index: 3, kind: output, shape index: {0}]
  %s4 = inlined_call_operand.vmem [shape: f32[8,1], index: 4, kind: output, shape index: {1}]
  %5 = xla_tuple %s3, %s4
  %s6 = sld [smem:[#allocation0]]
  $region38: #{cbow_forward.2} parent=0
    _
  %s8 = ssub.s32 1, %s6
  %s9 = scalar_select 0, %s8, %s6
  // Predicated region
  $region2: #{cbow_forward.2} parent=0 // pred_check
    _
  $region3: #{cbow_forward.2} parent=0 // pred_check_branch
    %11 = sbr.rel (0) target = $region5
  $region4: #{cbow_forward.2} parent=0 // pred_region
    _
  $region5: #{cbow_forward.2} parent=0 // pred_fallthru
    _
  // Predicated region
  $region6: #{cbow_forward.2} parent=0 // pred_check
    _
  $region7: #{cbow_forward.2} parent=0 // pred_check_branch
    %13 = sbr.rel (0) target = $region9
  $region8: #{cbow_forward.2} parent=0 // pred_region
    _
  $region9: #{cbow_forward.2} parent=0 // pred_fallthru
    _
  // Predicated region
  $region10: #{cbow_forward.2} parent=0 // pred_check
    _
  $region11: #{cbow_forward.2} parent=0 // pred_check_branch
    %15 = sbr.rel (0) target = $region13
  $region12: #{cbow_forward.2} parent=0 // pred_region
    _
  $region13: #{cbow_forward.2} parent=0 // pred_fallthru
    _
  %p16 = scmp.eq.s32.totalorder 0, 0
  // Predicated region
  $region14: #{cbow_forward.2} parent=0 // pred_check
    %p17 = pneg %p16
  $region15: #{cbow_forward.2} parent=0 // pred_check_branch
    %19 = sbr.rel (%p17) target = $region17
  $region16: #{cbow_forward.2} parent=0 // pred_region
    %vm20 = vcmask 7168
    %21 = vst.msk [vmem:[#allocation2] sm:$0xff] %vm20, -1e+30
    %22 = vst.msk [vmem:[#allocation3] sm:$0xff] %vm20, 0.0
  $region17: #{cbow_forward.2} parent=0 // pred_fallthru
    _
  %v23 = vld [vmem:[%s0] sm:$0xff]
  %v24 = vld [vmem:[%s1] sm:$0xff]
  %v25 = vld [vmem:[%s1 + $0x8] sm:$0xff]
  %v26 = vld [vmem:[%s1 + $0x10] sm:$0xff]
  %v27 = vld [vmem:[%s1 + $0x18] sm:$0xff]
  %v28 = vld [vmem:[%s1 + $0x20] sm:$0xff]
  %v29 = vld [vmem:[%s1 + $0x28] sm:$0xff]
  %v30 = vld [vmem:[%s1 + $0x30] sm:$0xff]
  %v31 = vld [vmem:[%s1 + $0x38] sm:$0xff]
  %v32 = vld [vmem:[%s1 + $0x40] sm:$0xff]
  %v33 = vld [vmem:[%s1 + $0x48] sm:$0xff]
  %v34 = vld [vmem:[%s1 + $0x50] sm:$0xff]
  %v35 = vld [vmem:[%s1 + $0x58] sm:$0xff]
  %v36 = vld [vmem:[%s1 + $0x60] sm:$0xff]
  %v37 = vld [vmem:[%s1 + $0x68] sm:$0xff]
  %v38 = vld [vmem:[%s1 + $0x70] sm:$0xff]
  %v39 = vld [vmem:[%s1 + $0x78] sm:$0xff]
  %v40 = vld [vmem:[%s2] sm:$0x1]
  %v42 = vlaneseq
  %v43 = vshrl.u32 %v42, 7
  %v44 = vsub.s32 0, %v43
  %v45 = vrot.slane %v40, %v44
  %vm47 = vcmask 261120
  %v49 = vsel %vm47, %v23, 0
  %v52 = vsel %vm47, %v24, 0
  %v55 = vsel %vm47, %v25, 0
  %v58 = vsel %vm47, %v26, 0
  %v61 = vsel %vm47, %v27, 0
  %v64 = vsel %vm47, %v28, 0
  %v67 = vsel %vm47, %v29, 0
  %v70 = vsel %vm47, %v30, 0
  %v73 = vsel %vm47, %v31, 0
  %v76 = vsel %vm47, %v32, 0
  %v79 = vsel %vm47, %v33, 0
  %v82 = vsel %vm47, %v34, 0
  %v85 = vsel %vm47, %v35, 0
  %v88 = vsel %vm47, %v36, 0
  %v91 = vsel %vm47, %v37, 0
  %v94 = vsel %vm47, %v38, 0
  %v97 = vsel %vm47, %v39, 0
  %99 = vmatprep.subr.mxu0 0.0
  %100 = vmatpush1.xpose.msra.mxu0 %v52
  %101 = vmatprep.subr.mxu0 0.0
  %102 = vmatpush1.xpose.msra.mxu0 %v55
  %103 = vmatprep.subr.mxu0 0.0
  %104 = vmatpush1.xpose.msra.mxu0 %v58
  %105 = vmatprep.subr.mxu0 0.0
  %106 = vmatpush1.xpose.msra.mxu0 %v61
  %107 = vmatprep.subr.mxu0 0.0
  %108 = vmatpush1.xpose.msra.mxu0 %v64
  %109 = vmatprep.subr.mxu0 0.0
  %110 = vmatpush1.xpose.msra.mxu0 %v67
  %111 = vmatprep.subr.mxu0 0.0
  %112 = vmatpush1.xpose.msra.mxu0 %v70
  %113 = vmatprep.subr.mxu0 0.0
  %114 = vmatpush1.xpose.msra.mxu0 %v73
  %115 = vmatprep.subr.mxu0 0.0
  %116 = vmatpush1.xpose.msra.mxu0 %v76
  %117 = vmatprep.subr.mxu0 0.0
  %118 = vmatpush1.xpose.msra.mxu0 %v79
  %119 = vmatprep.subr.mxu0 0.0
  %120 = vmatpush1.xpose.msra.mxu0 %v82
  %121 = vmatprep.subr.mxu0 0.0
  %122 = vmatpush1.xpose.msra.mxu0 %v85
  %123 = vmatprep.subr.mxu0 0.0
  %124 = vmatpush1.xpose.msra.mxu0 %v88
  %125 = vmatprep.subr.mxu0 0.0
  %126 = vmatpush1.xpose.msra.mxu0 %v91
  %127 = vmatprep.subr.mxu0 0.0
  %128 = vmatpush1.xpose.msra.mxu0 %v94
  %129 = vmatprep.subr.mxu0 0.0
  %130 = vmatpush1.xpose.msra.mxu0 %v97
  %131 = vmatprep.subr.mxu0 0.0
  %132 = vmatpush1.xpose.msra.mxu0 0.0
  %133 = vmatprep.subr.mxu0 0.0
  %134 = vmatpush1.xpose.msra.mxu0 0.0
  %135 = vmatprep.subr.mxu0 0.0
  %136 = vmatpush1.xpose.msra.mxu0 0.0
  %137 = vmatprep.subr.mxu0 0.0
  %138 = vmatpush1.xpose.msra.mxu0 0.0
  %139 = vmatprep.subr.mxu0 0.0
  %140 = vmatpush1.xpose.msra.mxu0 0.0
  %141 = vmatprep.subr.mxu0 0.0
  %142 = vmatpush1.xpose.msra.mxu0 0.0
  %143 = vmatprep.subr.mxu0 0.0
  %144 = vmatpush1.xpose.msra.mxu0 0.0
  %145 = vmatprep.subr.mxu0 0.0
  %146 = vmatpush1.xpose.msra.mxu0 0.0
  %147 = vmatprep.subr.mxu0 0.0
  %148 = vmatpush1.xpose.msra.mxu0 0.0
  %149 = vmatprep.subr.mxu0 0.0
  %150 = vmatpush1.xpose.msra.mxu0 0.0
  %151 = vmatprep.subr.mxu0 0.0
  %152 = vmatpush1.xpose.msra.mxu0 0.0
  %153 = vmatprep.subr.mxu0 0.0
  %154 = vmatpush1.xpose.msra.mxu0 0.0
  %155 = vmatprep.subr.mxu0 0.0
  %156 = vmatpush1.xpose.msra.mxu0 0.0
  %157 = vmatprep.subr.mxu0 0.0
  %158 = vmatpush1.xpose.msra.mxu0 0.0
  %159 = vmatprep.subr.mxu0 0.0
  %160 = vmatpush1.xpose.msra.mxu0 0.0
  %161 = vmatprep.subr.mxu0 0.0
  %162 = vmatpush1.xpose.msra.mxu0 0.0
  %163 = vmatprep.mubr.f32.mxu0 0.0
  %164 = vmatmul.mubr.f32.gmra.mrb[0].mxu0 %v49
  %v165 = vpop.f32.mrb[0].mxu0
  %v166 = vadd.f32 %v45, %v165
  %v167 = vpop.f32.mrb[0].mxu0
  %168 = vdwg.mxu0
  %169 = vst [vmem:[%s3] sm:$0xff] %v166
  %v170 = vld [vmem:[#allocation2] sm:$0xff]
  %171 = vmax.xlane.f32.xlu0 %v166
  %v172 = vpop.xlane.xlu0 %171
  %v173 = vmax.f32 %v170, %v172
  %v174 = vld [vmem:[#allocation3] sm:$0xff]
  %v175 = vsub.f32 %v170, %v173
  %v176 = vmul.f32 %v175, 1.442695
  %v177 = vpow.pop %v176
  %v178 = vmul.f32 %v174, %v177
  %180 = vset.pattern.permute.xlu0 0
  %181 = vperm.xlu0 %180, %v173
  %v182 = vpop.permute.xlu0 %181
  %v184 = vsub.f32 %v166, %v182
  %v185 = vmul.f32 %v184, 1.442695
  %v186 = vpow.pop %v185
  %187 = vadd.xlane.f32.xlu0 %v186
  %v188 = vpop.xlane.xlu0 %187
  %v189 = vadd.f32 %v178, %v188
  %vm190 = vcmask 7168
  %191 = vst.msk [vmem:[#allocation3] sm:$0xff] %vm190, %v189
  %192 = vst.msk [vmem:[#allocation2] sm:$0xff] %vm190, %v173
  // Predicated region
  $region18: #{cbow_forward.2} parent=0 // pred_check
    %p193 = pneg %p16
  $region19: #{cbow_forward.2} parent=0 // pred_check_branch
    %195 = sbr.rel (%p193) target = $region21
  $region20: #{cbow_forward.2} parent=0 // pred_region
    %v196 = vld [vmem:[#allocation2] sm:$0xff]
    %v197 = vld [vmem:[#allocation3] sm:$0xff]
    %v198 = vlog2.pop %v197
    %v199 = vmul.f32 %v198, 0.6931472
    %v200 = vadd.f32 %v196, %v199
    %201 = vst.msk [vmem:[%s4] sm:$0xff] %vm190, %v200
  $region21: #{cbow_forward.2} parent=0 // pred_fallthru
    _
  // Predicated region
  $region22: #{cbow_forward.2} parent=0 // pred_check
    _
  $region23: #{cbow_forward.2} parent=0 // pred_check_branch
    %203 = sbr.rel (0) target = $region25
  $region24: #{cbow_forward.2} parent=0 // pred_region
    _
  $region25: #{cbow_forward.2} parent=0 // pred_fallthru
    _
  // Predicated region
  $region26: #{cbow_forward.2} parent=0 // pred_check
    _
  $region27: #{cbow_forward.2} parent=0 // pred_check_branch
    %205 = sbr.rel (0) target = $region29
  $region28: #{cbow_forward.2} parent=0 // pred_region
    _
  $region29: #{cbow_forward.2} parent=0 // pred_fallthru
    _
  // Predicated region
  $region30: #{cbow_forward.2} parent=0 // pred_check
    _
  $region31: #{cbow_forward.2} parent=0 // pred_check_branch
    %207 = sbr.rel (0) target = $region33
  $region32: #{cbow_forward.2} parent=0 // pred_region
    _
  $region33: #{cbow_forward.2} parent=0 // pred_fallthru
    _
  // Predicated region
  $region34: #{cbow_forward.2} parent=0 // pred_check
    _
  $region35: #{cbow_forward.2} parent=0 // pred_check_branch
    %209 = sbr.rel (0) target = $region37
  $region36: #{cbow_forward.2} parent=0 // pred_region
    _
  $region37: #{cbow_forward.2} parent=0 // pred_fallthru
    _

</llo_original>
